<compile_context>
chip_gen: v7x
topology: tpu7x:2x2x1
jax: 0.10.0
libtpu: 0.0.40
codegen_flags: <defaults>
</compile_context>

<pallas_src>
import jax
import jax.numpy as jnp
from jax.experimental import pallas as pl
from jax.experimental.pallas import tpu as pltpu

BN_EPS = 1e-5
LEAKY_SLOPE = 0.01        # PyTorch nn.LeakyReLU default negative_slope
LANE = 128
SUBLANE = 8
MAX_TK = 2048             # reduction tile over streamed node rows
VMEM_TILE_BYTES = 4 * 1024 * 1024   # per-buffer budget for the streamed tile


def _round_up(a, b):
    return ((a + b - 1) // b) * b


def _cdiv(a, b):
    return (a + b - 1) // b


def _dct_moe_kernel(scal_ref,                     # SMEM: [num_graphs, n_valid]
                    pid_ref, x_ref, inv_cnt_ref, bn_ref,
                    w1_ref, bias_ref, wf_ref,
                    out_ref, acc_ref):
    """Grid axis 0 streams (tk)-row tiles of the node features (reduction)."""
    k = pl.program_id(0)
    tk = x_ref.shape[0]
    g_pad = acc_ref.shape[0]

    @pl.when(k == 0)
    def _init():
        acc_ref[...] = jnp.zeros_like(acc_ref)

    n_valid = scal_ref[1]

    # global_mean_pool numerator: one-hot pooling tile built in-kernel from the
    # per-node graph id (-1 for non-image / padded nodes never matches).
    ids = pid_ref[...]                                             # (1, tk) i32
    gids = jax.lax.broadcasted_iota(jnp.int32, (g_pad, tk), 0)
    onehot = (ids == gids).astype(jnp.float32)                     # (g_pad, tk)

    # Mask rows beyond the real row count (partial trailing tile / stale VMEM)
    # so garbage never reaches the MXU accumulation.
    ridx = jax.lax.broadcasted_iota(jnp.int32, (tk, 1), 0) + k * tk
    xv = jnp.where(ridx < n_valid, x_ref[...].astype(jnp.float32), 0.0)

    acc_ref[...] += jnp.dot(onehot, xv, preferred_element_type=jnp.float32)

    @pl.when(k == pl.num_programs(0) - 1)
    def _finalize():
        ng = scal_ref[0]
        pooled = acc_ref[...] * inv_cnt_ref[...]                   # (g_pad, D)

        # BatchNorm1d (train mode, biased variance) over the REAL graphs only;
        # padded rows are masked out of the statistics.
        row = jax.lax.broadcasted_iota(jnp.int32, pooled.shape, 0)
        maskf = (row < ng).astype(jnp.float32)
        inv_g = 1.0 / ng.astype(jnp.float32)
        mean = jnp.sum(pooled * maskf, axis=0, keepdims=True) * inv_g
        centered = pooled - mean
        var = jnp.sum(centered * centered * maskf, axis=0, keepdims=True) * inv_g
        normed = centered * jax.lax.rsqrt(var + BN_EPS)
        normed = normed * bn_ref[0:1, :] + bn_ref[1:2, :]

        # encodeMLP fc1 + LeakyReLU.
        h_pad = w1_ref.shape[1]
        h = jnp.dot(normed, w1_ref[...], preferred_element_type=jnp.float32)
        h = h + bias_ref[0:1, :h_pad]
        h = jnp.where(h >= 0, h, LEAKY_SLOPE * h)

        # fc2 and the 2-way output head fused into one lane-dense matmul:
        # slab[:, :FOUT] = feat, slab[:, FOUT:FOUT+2] = prob (logits).
        o_pad = wf_ref.shape[1]
        slab = jnp.dot(h, wf_ref[...], preferred_element_type=jnp.float32)
        slab = slab + bias_ref[1:2, :o_pad]
        out_ref[...] = slab.astype(out_ref.dtype)
    # NOTE: self.dropout is defined in __init__ but never applied in forward().


def init_params(key, embedding_dim, hidden=64, feature_out=32):
    ks = jax.random.split(key, 6)
    s = lambda fan_in: 1.0 / jnp.sqrt(fan_in)
    return {
        # BatchNorm1d affine
        "gamma": jnp.ones((1, embedding_dim), jnp.float32),
        "beta": jnp.zeros((1, embedding_dim), jnp.float32),
        # fc1: Linear(embedding_dim, hidden)  (stored [in, out])
        "w1": jax.random.uniform(ks[0], (embedding_dim, hidden), jnp.float32,
                                 -s(embedding_dim), s(embedding_dim)),
        "b1": jax.random.uniform(ks[1], (1, hidden), jnp.float32,
                                 -s(embedding_dim), s(embedding_dim)),
        # fc2: Linear(hidden, feature_out)
        "w2": jax.random.uniform(ks[2], (hidden, feature_out), jnp.float32,
                                 -s(hidden), s(hidden)),
        "b2": jax.random.uniform(ks[3], (1, feature_out), jnp.float32,
                                 -s(hidden), s(hidden)),
        # output: Linear(feature_out, 2)
        "wo": jax.random.uniform(ks[4], (feature_out, 2), jnp.float32,
                                 -s(feature_out), s(feature_out)),
        "bo": jax.random.uniform(ks[5], (1, 2), jnp.float32,
                                 -s(feature_out), s(feature_out)),
    }


def prepare_params(params):
    """One-time prep: fuse the output head into fc2, pack the small constants,
    and zero-pad the MLP feature dims to 128 lanes.  The streamed node-feature
    dim D is intentionally left unpadded — the kernel reads x as-is."""
    D, H = params["w1"].shape
    FOUT = params["w2"].shape[1]
    Hp = _round_up(H, LANE)
    Op = _round_up(FOUT + 2, LANE)
    BW = max(Hp, Op)

    def pad2(a, r, c):
        return jnp.pad(a, ((0, r - a.shape[0]), (0, c - a.shape[1])))

    # prob = feat @ wo + bo = h @ (w2 @ wo) + (b2 @ wo + bo)
    wf = jnp.concatenate([params["w2"], params["w2"] @ params["wo"]], axis=1)
    bf = jnp.concatenate(
        [params["b2"], params["b2"] @ params["wo"] + params["bo"]], axis=1)

    bias = jnp.zeros((2, BW), jnp.float32)
    bias = bias.at[0:1, :H].set(params["b1"])
    bias = bias.at[1:2, :FOUT + 2].set(bf)

    return {
        "bn": jnp.concatenate([params["gamma"], params["beta"]], axis=0),  # [2,D]
        "w1": pad2(params["w1"], D, Hp),                                   # [D,Hp]
        "wf": pad2(wf, Hp, Op),                                            # [Hp,Op]
        "bias": bias,                                                      # [2,BW]
        "D": D, "H": H, "FOUT": FOUT, "Hp": Hp, "Op": Op,
    }


def dct_detection_model_moe(prep, x, batch_vec, image_idx, num_graphs):
    """x: [num_nodes, D] node features; batch_vec: [num_nodes] graph id per
    node; image_idx: [n_img] indices of image nodes. Returns (out, prob)."""
    D, FOUT, Op = prep["D"], prep["FOUT"], prep["Op"]
    num_nodes = int(x.shape[0])
    n_img = int(image_idx.shape[0])
    g_pad = _round_up(num_graphs, SUBLANE)

    # Per-graph image-node counts (tiny integer work, stays in XLA).
    img_batch = batch_vec[image_idx].astype(jnp.int32)
    counts = jnp.zeros((num_graphs,), jnp.float32).at[img_batch].add(1.0)
    inv_cnt = 1.0 / jnp.maximum(counts, 1.0)
    inv_cnt = jnp.pad(inv_cnt, (0, g_pad - num_graphs),
                      constant_values=1.0)[:, None]                 # [g_pad, 1]

    if 3 * n_img >= num_nodes:
        # Stream ALL node rows once; non-image nodes get pool id -1 so they
        # never match a row of the in-kernel one-hot -> no gather, no
        # materialized x_img, node features read from HBM exactly once.
        is_img = jnp.zeros((num_nodes,), jnp.int32).at[image_idx].set(1)
        pool_id = jnp.where(is_img == 1, batch_vec.astype(jnp.int32), -1)
        feats = x
    else:
        # Image nodes are a small fraction: one fused XLA gather into a compact
        # stream is cheaper than streaming everything.
        # TODO(synk): fold this gather into the kernel (scalar-prefetched
        # image_idx + manual per-row DMA from x kept in HBM via pl.ANY).
        pool_id = img_batch
        feats = x[image_idx]
    n_rows = int(feats.shape[0])

    # Reduction tile: big enough to amortize the ~0.35us per-grid-step
    # overhead, capped by a per-buffer VMEM budget for the streamed tile.
    row_bytes = D * feats.dtype.itemsize
    tk = min(MAX_TK, max(LANE, (VMEM_TILE_BYTES // row_bytes) // LANE * LANE))
    if n_rows <= tk:
        # Single grid step: pad the (small) stream so block == array exactly.
        tk = _round_up(max(n_rows, 1), LANE)
        feats = jnp.pad(feats, ((0, tk - n_rows), (0, 0)))
        pool_id = jnp.pad(pool_id, (0, tk - n_rows), constant_values=-1)
    # else: the trailing tile may be partial; the in-kernel row mask (built
    # from the real row count) zeroes out-of-range rows before the MXU.

    n_total = int(feats.shape[0])
    n_k = _cdiv(n_total, tk)
    pool_id2d = pool_id[None, :]
    scalars = jnp.array([num_graphs, n_rows], dtype=jnp.int32)

    def fixed(k, s):
        return (0, 0)

    slab = pl.pallas_call(
        _dct_moe_kernel,
        out_shape=jax.ShapeDtypeStruct((g_pad, Op), jnp.float32),
        grid_spec=pltpu.PrefetchScalarGridSpec(
            num_scalar_prefetch=1,
            grid=(n_k,),
            in_specs=[
                pl.BlockSpec((1, tk), lambda k, s: (0, k)),      # pool ids tile
                pl.BlockSpec((tk, D), lambda k, s: (k, 0)),      # node feats tile
                pl.BlockSpec((g_pad, 1), fixed),                 # 1/counts
                pl.BlockSpec(prep["bn"].shape, fixed),           # gamma | beta
                pl.BlockSpec(prep["w1"].shape, fixed),           # fc1 weight
                pl.BlockSpec(prep["bias"].shape, fixed),         # b1 | fused bias
                pl.BlockSpec(prep["wf"].shape, fixed),           # fused fc2+head
            ],
            out_specs=pl.BlockSpec((g_pad, Op), fixed),
            scratch_shapes=[pltpu.VMEM((g_pad, D), jnp.float32)],
        ),
        compiler_params=pltpu.CompilerParams(
            dimension_semantics=("arbitrary",),
            vmem_limit_bytes=32 * 1024 * 1024),
    )(scalars, pool_id2d, feats, inv_cnt,
      prep["bn"], prep["w1"], prep["bias"], prep["wf"])

    out = slab[:num_graphs, :FOUT]
    prob = slab[:num_graphs, FOUT:FOUT + 2]
    return out, prob


def _reference(params, x, batch_vec, image_idx, num_graphs):
    """Pure-JAX f32 reference with the original (unfused) op order."""
    x_img = x[image_idx]
    img_batch = batch_vec[image_idx]
    onehot = (img_batch[None, :] ==
              jnp.arange(num_graphs)[:, None]).astype(jnp.float32)
    counts = jnp.maximum(onehot.sum(axis=1, keepdims=True), 1.0)
    pooled = (onehot / counts) @ x_img
    mean = pooled.mean(axis=0, keepdims=True)
    var = ((pooled - mean) ** 2).mean(axis=0, keepdims=True)
    normed = (pooled - mean) / jnp.sqrt(var + BN_EPS)
    normed = normed * params["gamma"] + params["beta"]
    h = normed @ params["w1"] + params["b1"]
    h = jnp.where(h >= 0, h, LEAKY_SLOPE * h)
    feat = h @ params["w2"] + params["b2"]
    prob = feat @ params["wo"] + params["bo"]
    return feat, prob


if __name__ == "__main__":
    key = jax.random.PRNGKey(0)
    k_param, k_x = jax.random.split(key)

    embedding_dim = 32
    hidden = 64
    feature_out = 32

    params = init_params(k_param, embedding_dim, hidden, feature_out)
    prep = prepare_params(params)

    # --- case 1: small batch, image nodes are a large fraction (stream-all) --
    num_graphs = 4
    nodes_per_graph = 6
    num_nodes = num_graphs * nodes_per_graph
    x = jax.random.normal(k_x, (num_nodes, embedding_dim), jnp.float32)
    batch_vec = jnp.repeat(jnp.arange(num_graphs, dtype=jnp.int32),
                           nodes_per_graph)
    image_idx = jnp.concatenate(
        [jnp.array([g * nodes_per_graph, g * nodes_per_graph + 1],
                   dtype=jnp.int32) for g in range(num_graphs)])

    ref_out, ref_prob = _reference(params, x, batch_vec, image_idx, num_graphs)
    out, prob = dct_detection_model_moe(prep, x, batch_vec, image_idx,
                                        num_graphs)
    jax.block_until_ready((out, prob))
    assert out.shape == (num_graphs, feature_out)
    assert prob.shape == (num_graphs, 2)
    assert jnp.allclose(out, ref_out, atol=1e-4, rtol=1e-4)
    assert jnp.allclose(prob, ref_prob, atol=1e-4, rtol=1e-4)

    # --- case 2: image nodes are a small fraction (compact-gather path) ------
    num_graphs2 = 4
    nodes_per_graph2 = 50
    num_nodes2 = num_graphs2 * nodes_per_graph2
    x2 = jax.random.normal(jax.random.PRNGKey(1),
                           (num_nodes2, embedding_dim), jnp.float32)
    batch_vec2 = jnp.repeat(jnp.arange(num_graphs2, dtype=jnp.int32),
                            nodes_per_graph2)
    image_idx2 = jnp.concatenate(
        [g * nodes_per_graph2 + jnp.arange(3, dtype=jnp.int32)
         for g in range(num_graphs2)])
    ref_out2, ref_prob2 = _reference(params, x2, batch_vec2, image_idx2,
                                     num_graphs2)
    out2, prob2 = dct_detection_model_moe(prep, x2, batch_vec2, image_idx2,
                                          num_graphs2)
    jax.block_until_ready((out2, prob2))
    assert jnp.allclose(out2, ref_out2, atol=1e-4, rtol=1e-4)
    assert jnp.allclose(prob2, ref_prob2, atol=1e-4, rtol=1e-4)

    # --- case 3: many nodes -> multi-tile reduction grid (n_k > 1) with a ----
    #     partial trailing tile (exercises the in-kernel row mask)
    num_graphs3 = 16
    nodes_per_graph3 = 200
    num_nodes3 = num_graphs3 * nodes_per_graph3        # 3200 = 2048 + 1152
    x3 = jax.random.normal(jax.random.PRNGKey(2),
                           (num_nodes3, embedding_dim), jnp.float32)
    batch_vec3 = jnp.repeat(jnp.arange(num_graphs3, dtype=jnp.int32),
                            nodes_per_graph3)
    image_idx3 = jnp.arange(num_nodes3, dtype=jnp.int32)  # all nodes = image
    ref_out3, ref_prob3 = _reference(params, x3, batch_vec3, image_idx3,
                                     num_graphs3)
    out3, prob3 = dct_detection_model_moe(prep, x3, batch_vec3, image_idx3,
                                          num_graphs3)
    jax.block_until_ready((out3, prob3))
    assert jnp.allclose(out3, ref_out3, atol=1e-4, rtol=1e-4)
    assert jnp.allclose(prob3, ref_prob3, atol=1e-4, rtol=1e-4)

    print("KERNEL_OK")
</pallas_src>

<mosaic_0001>
module attributes {stable_mosaic.version = 11 : i64} {
  func.func @_dct_moe_kernel(%arg0: i32, %arg1: memref<2xi32, #tpu.memory_space<smem>>, %arg2: memref<1x128xi32, #tpu.memory_space<vmem>>, %arg3: memref<128x32xf32, #tpu.memory_space<vmem>>, %arg4: memref<8x1xf32, #tpu.memory_space<vmem>>, %arg5: memref<2x32xf32, #tpu.memory_space<vmem>>, %arg6: memref<32x128xf32, #tpu.memory_space<vmem>>, %arg7: memref<2x128xf32, #tpu.memory_space<vmem>>, %arg8: memref<128x128xf32, #tpu.memory_space<vmem>>, %arg9: memref<8x128xf32, #tpu.memory_space<vmem>>, %arg10: memref<8x32xf32, #tpu.memory_space<vmem>>) attributes {dimension_semantics = [#tpu.dimension_semantics<arbitrary>], iteration_bounds = array<i64: 1>, scalar_prefetch = 1 : i64, scratch_operands = 1 : i64, tpu.core_type = #tpu.core_type<tc>, window_params = [{transform_indices = @transform_0, window_bounds = array<i64: 1, 128>}, {transform_indices = @transform_1, window_bounds = array<i64: 128, 32>}, {pipeline_mode = #tpu.pipeline_mode<synchronous>, transform_indices = @transform_2, window_bounds = array<i64: 8, 1>}, {pipeline_mode = #tpu.pipeline_mode<synchronous>, transform_indices = @transform_3, window_bounds = array<i64: 2, 32>}, {pipeline_mode = #tpu.pipeline_mode<synchronous>, transform_indices = @transform_4, window_bounds = array<i64: 32, 128>}, {pipeline_mode = #tpu.pipeline_mode<synchronous>, transform_indices = @transform_5, window_bounds = array<i64: 2, 128>}, {pipeline_mode = #tpu.pipeline_mode<synchronous>, transform_indices = @transform_6, window_bounds = array<i64: 128, 128>}, {pipeline_mode = #tpu.pipeline_mode<synchronous>, transform_indices = @transform_7, window_bounds = array<i64: 8, 128>}]} {
    %c0_i32 = arith.constant 0 : i32
    %0 = arith.cmpi eq, %arg0, %c0_i32 : i32
    %1 = arith.extui %0 : i1 to i32
    %c0_i32_0 = arith.constant 0 : i32
    %2 = arith.cmpi ne, %1, %c0_i32_0 : i32
    scf.if %2 {
      %cst_11 = arith.constant 0.000000e+00 : f32
      %28 = vector.broadcast %cst_11 : f32 to vector<8x32xf32>
      %c0_12 = arith.constant 0 : index
      %c0_13 = arith.constant 0 : index
      %29 = vector.load %arg10[%c0_12, %c0_13] : memref<8x32xf32, #tpu.memory_space<vmem>>, vector<8x32xf32>
      tpu.vector_store %arg10[%c0_12, %c0_13], %28 {strides = array<i32>} : memref<8x32xf32, #tpu.memory_space<vmem>>, vector<8x32xf32>,
    } else {
    }
    %c1 = arith.constant 1 : index
    %3 = memref.load %arg1[%c1] : memref<2xi32, #tpu.memory_space<smem>>
    %c0 = arith.constant 0 : index
    %c0_1 = arith.constant 0 : index
    %4 = vector.load %arg2[%c0, %c0_1] : memref<1x128xi32, #tpu.memory_space<vmem>>, vector<1x128xi32>
    %5 = tpu.iota {dimensions = array<i32: 0>} : vector<8x128xi32>
    %6 = vector.broadcast %4 : vector<1x128xi32> to vector<8x128xi32>
    %7 = arith.cmpi eq, %6, %5 : vector<8x128xi32>
    %8 = arith.extui %7 : vector<8x128xi1> to vector<8x128xi32>
    %9 = arith.sitofp %8 : vector<8x128xi32> to vector<8x128xf32>
    %10 = tpu.iota {dimensions = array<i32: 0>} : vector<128x1xi32>
    %c128_i32 = arith.constant 128 : i32
    %11 = arith.muli %arg0, %c128_i32 : i32
    %12 = vector.broadcast %11 : i32 to vector<128x1xi32>
    %13 = arith.addi %10, %12 : vector<128x1xi32>
    %14 = vector.broadcast %3 : i32 to vector<128x1xi32>
    %15 = arith.cmpi slt, %13, %14 : vector<128x1xi32>
    %c0_2 = arith.constant 0 : index
    %c0_3 = arith.constant 0 : index
    %16 = vector.load %arg3[%c0_2, %c0_3] : memref<128x32xf32, #tpu.memory_space<vmem>>, vector<128x32xf32>
    %cst = arith.constant 0.000000e+00 : f32
    %17 = vector.shape_cast %15 : vector<128x1xi1> to vector<128x1xi1>
    %18 = vector.broadcast %17 : vector<128x1xi1> to vector<128x32xi1>
    %19 = vector.broadcast %cst : f32 to vector<128x32xf32>
    %20 = arith.select %18, %16, %19 : vector<128x32xi1>, vector<128x32xf32>
    %c0_4 = arith.constant 0 : index
    %c0_5 = arith.constant 0 : index
    %21 = vector.load %arg10[%c0_4, %c0_5] : memref<8x32xf32, #tpu.memory_space<vmem>>, vector<8x32xf32>
    %cst_6 = arith.constant dense<0.000000e+00> : vector<8x32xf32>
    %22 = tpu.matmul %9, %20, %cst_6 {dimension_numbers = #tpu.dot_dimension_numbers<[1], [0], [0], [1], [0, 0, 1, 1], [], []>} : vector<8x128xf32>, vector<128x32xf32>, vector<8x32xf32> -> vector<8x32xf32>
    %23 = arith.addf %21, %22 : vector<8x32xf32>
    %c0_7 = arith.constant 0 : index
    %c0_8 = arith.constant 0 : index
    %24 = vector.load %arg10[%c0_7, %c0_8] : memref<8x32xf32, #tpu.memory_space<vmem>>, vector<8x32xf32>
    tpu.vector_store %arg10[%c0_7, %c0_8], %23 {strides = array<i32>} : memref<8x32xf32, #tpu.memory_space<vmem>>, vector<8x32xf32>,
    %c0_i32_9 = arith.constant 0 : i32
    %25 = arith.cmpi eq, %arg0, %c0_i32_9 : i32
    %26 = arith.extui %25 : i1 to i32
    %c0_i32_10 = arith.constant 0 : i32
    %27 = arith.cmpi ne, %26, %c0_i32_10 : i32
    scf.if %27 {
      %c0_11 = arith.constant 0 : index
      %28 = memref.load %arg1[%c0_11] : memref<2xi32, #tpu.memory_space<smem>>
      %c0_12 = arith.constant 0 : index
      %c0_13 = arith.constant 0 : index
      %29 = vector.load %arg10[%c0_12, %c0_13] : memref<8x32xf32, #tpu.memory_space<vmem>>, vector<8x32xf32>
      %c0_14 = arith.constant 0 : index
      %c0_15 = arith.constant 0 : index
      %30 = vector.load %arg4[%c0_14, %c0_15] : memref<8x1xf32, #tpu.memory_space<vmem>>, vector<8x1xf32>
      %31 = vector.broadcast %30 : vector<8x1xf32> to vector<8x32xf32>
      %32 = arith.mulf %29, %31 : vector<8x32xf32>
      %33 = tpu.iota {dimensions = array<i32: 0>} : vector<8x32xi32>
      %34 = vector.broadcast %28 : i32 to vector<8x32xi32>
      %35 = arith.cmpi slt, %33, %34 : vector<8x32xi32>
      %36 = arith.extui %35 : vector<8x32xi1> to vector<8x32xi32>
      %37 = arith.sitofp %36 : vector<8x32xi32> to vector<8x32xf32>
      %38 = arith.sitofp %28 : i32 to f32
      %cst_16 = arith.constant 1.000000e+00 : f32
      %39 = arith.divf %cst_16, %38 : f32
      %40 = arith.mulf %32, %37 : vector<8x32xf32>
      %cst_17 = arith.constant dense<0.000000e+00> : vector<32xf32>
      %41 = vector.multi_reduction <add>, %40, %cst_17 [0] : vector<8x32xf32> to vector<32xf32>
      %42 = vector.shape_cast %41 : vector<32xf32> to vector<1x32xf32>
      %43 = vector.broadcast %39 : f32 to vector<1x32xf32>
      %44 = arith.mulf %42, %43 : vector<1x32xf32>
      %45 = vector.broadcast %44 : vector<1x32xf32> to vector<8x32xf32>
      %46 = arith.subf %32, %45 : vector<8x32xf32>
      %47 = arith.mulf %46, %46 : vector<8x32xf32>
      %48 = arith.mulf %47, %37 : vector<8x32xf32>
      %cst_18 = arith.constant dense<0.000000e+00> : vector<32xf32>
      %49 = vector.multi_reduction <add>, %48, %cst_18 [0] : vector<8x32xf32> to vector<32xf32>
      %50 = vector.shape_cast %49 : vector<32xf32> to vector<1x32xf32>
      %51 = vector.broadcast %39 : f32 to vector<1x32xf32>
      %52 = arith.mulf %50, %51 : vector<1x32xf32>
      %cst_19 = arith.constant 9.99999974E-6 : f32
      %53 = vector.broadcast %cst_19 : f32 to vector<1x32xf32>
      %54 = arith.addf %52, %53 : vector<1x32xf32>
      %55 = math.rsqrt %54 : vector<1x32xf32>
      %56 = vector.broadcast %55 : vector<1x32xf32> to vector<8x32xf32>
      %57 = arith.mulf %46, %56 : vector<8x32xf32>
      %c0_20 = arith.constant 0 : index
      %c0_21 = arith.constant 0 : index
      %58 = vector.load %arg5[%c0_20, %c0_21] : memref<2x32xf32, #tpu.memory_space<vmem>>, vector<1x32xf32>
      %59 = vector.broadcast %58 : vector<1x32xf32> to vector<8x32xf32>
      %60 = arith.mulf %57, %59 : vector<8x32xf32>
      %c1_22 = arith.constant 1 : index
      %c0_23 = arith.constant 0 : index
      %61 = vector.load %arg5[%c1_22, %c0_23] : memref<2x32xf32, #tpu.memory_space<vmem>>, vector<1x32xf32>
      %62 = vector.broadcast %61 : vector<1x32xf32> to vector<8x32xf32>
      %63 = arith.addf %60, %62 : vector<8x32xf32>
      %c0_24 = arith.constant 0 : index
      %c0_25 = arith.constant 0 : index
      %64 = vector.load %arg6[%c0_24, %c0_25] : memref<32x128xf32, #tpu.memory_space<vmem>>, vector<32x128xf32>
      %cst_26 = arith.constant dense<0.000000e+00> : vector<8x128xf32>
      %65 = tpu.matmul %63, %64, %cst_26 {dimension_numbers = #tpu.dot_dimension_numbers<[1], [0], [0], [1], [0, 0, 1, 1], [], []>} : vector<8x32xf32>, vector<32x128xf32>, vector<8x128xf32> -> vector<8x128xf32>
      %c0_27 = arith.constant 0 : index
      %c0_28 = arith.constant 0 : index
      %66 = vector.load %arg7[%c0_27, %c0_28] : memref<2x128xf32, #tpu.memory_space<vmem>>, vector<1x128xf32>
      %67 = vector.broadcast %66 : vector<1x128xf32> to vector<8x128xf32>
      %68 = arith.addf %65, %67 : vector<8x128xf32>
      %cst_29 = arith.constant 0.000000e+00 : f32
      %69 = vector.broadcast %cst_29 : f32 to vector<8x128xf32>
      %70 = arith.cmpf oge, %68, %69 : vector<8x128xf32>
      %cst_30 = arith.constant 0.00999999977 : f32
      %71 = vector.broadcast %cst_30 : f32 to vector<8x128xf32>
      %72 = arith.mulf %71, %68 : vector<8x128xf32>
      %73 = arith.select %70, %68, %72 : vector<8x128xi1>, vector<8x128xf32>
      %c0_31 = arith.constant 0 : index
      %c0_32 = arith.constant 0 : index
      %74 = vector.load %arg8[%c0_31, %c0_32] : memref<128x128xf32, #tpu.memory_space<vmem>>, vector<128x128xf32>
      %cst_33 = arith.constant dense<0.000000e+00> : vector<8x128xf32>
      %75 = tpu.matmul %73, %74, %cst_33 {dimension_numbers = #tpu.dot_dimension_numbers<[1], [0], [0], [1], [0, 0, 1, 1], [], []>} : vector<8x128xf32>, vector<128x128xf32>, vector<8x128xf32> -> vector<8x128xf32>
      %c1_34 = arith.constant 1 : index
      %c0_35 = arith.constant 0 : index
      %76 = vector.load %arg7[%c1_34, %c0_35] : memref<2x128xf32, #tpu.memory_space<vmem>>, vector<1x128xf32>
      %77 = vector.broadcast %76 : vector<1x128xf32> to vector<8x128xf32>
      %78 = arith.addf %75, %77 : vector<8x128xf32>
      %c0_36 = arith.constant 0 : index
      %c0_37 = arith.constant 0 : index
      %79 = vector.load %arg9[%c0_36, %c0_37] : memref<8x128xf32, #tpu.memory_space<vmem>>, vector<8x128xf32>
      tpu.vector_store %arg9[%c0_36, %c0_37], %78 {strides = array<i32>} : memref<8x128xf32, #tpu.memory_space<vmem>>, vector<8x128xf32>,
    } else {
    }
    return
  }
  func.func @transform_0(%arg0: i32, %arg1: memref<2xi32, #tpu.memory_space<smem>>) -> (i32, i32) {
    %c0_i32 = arith.constant 0 : i32
    %c0_i32_0 = arith.constant 0 : i32
    return %c0_i32, %arg0 : i32, i32
  }
  func.func @transform_1(%arg0: i32, %arg1: memref<2xi32, #tpu.memory_space<smem>>) -> (i32, i32) {
    %c0_i32 = arith.constant 0 : i32
    %c0_i32_0 = arith.constant 0 : i32
    return %arg0, %c0_i32 : i32, i32
  }
  func.func @transform_2(%arg0: i32, %arg1: memref<2xi32, #tpu.memory_space<smem>>) -> (i32, i32) {
    %c0_i32 = arith.constant 0 : i32
    %c0_i32_0 = arith.constant 0 : i32
    %c0_i32_1 = arith.constant 0 : i32
    return %c0_i32, %c0_i32_0 : i32, i32
  }
  func.func @transform_3(%arg0: i32, %arg1: memref<2xi32, #tpu.memory_space<smem>>) -> (i32, i32) {
    %c0_i32 = arith.constant 0 : i32
    %c0_i32_0 = arith.constant 0 : i32
    %c0_i32_1 = arith.constant 0 : i32
    return %c0_i32, %c0_i32_0 : i32, i32
  }
  func.func @transform_4(%arg0: i32, %arg1: memref<2xi32, #tpu.memory_space<smem>>) -> (i32, i32) {
    %c0_i32 = arith.constant 0 : i32
    %c0_i32_0 = arith.constant 0 : i32
    %c0_i32_1 = arith.constant 0 : i32
    return %c0_i32, %c0_i32_0 : i32, i32
  }
  func.func @transform_5(%arg0: i32, %arg1: memref<2xi32, #tpu.memory_space<smem>>) -> (i32, i32) {
    %c0_i32 = arith.constant 0 : i32
    %c0_i32_0 = arith.constant 0 : i32
    %c0_i32_1 = arith.constant 0 : i32
    return %c0_i32, %c0_i32_0 : i32, i32
  }
  func.func @transform_6(%arg0: i32, %arg1: memref<2xi32, #tpu.memory_space<smem>>) -> (i32, i32) {
    %c0_i32 = arith.constant 0 : i32
    %c0_i32_0 = arith.constant 0 : i32
    %c0_i32_1 = arith.constant 0 : i32
    return %c0_i32, %c0_i32_0 : i32, i32
  }
  func.func @transform_7(%arg0: i32, %arg1: memref<2xi32, #tpu.memory_space<smem>>) -> (i32, i32) {
    %c0_i32 = arith.constant 0 : i32
    %c0_i32_0 = arith.constant 0 : i32
    %c0_i32_1 = arith.constant 0 : i32
    return %c0_i32, %c0_i32_0 : i32, i32
  }
}

</mosaic_0001>

<llo_original>
// kernel: tpu_custom_call.1
$region0: #{tpu_custom_call.1}
  #allocation0 [shape = 'u32[]', space=smem, size = 0x4, offset = 0x4, fixed_abs, tag = 'smem constant byte address 0x4 - core index']
  #allocation1 [shape = 'u32[144,128]{1,0:T(1,128)}', space=vmem, size = 0x12000, scoped, tag = 'internal scratch']
  #allocation2 [shape = 'f32[8,32]{1,0:T(8,128)}', space=vmem, size = 0x1000, scoped, tag = 'scratch operand']
  #allocation3 [shape = 's32[1]{0}', space=sflag, size = 0x4, scoped, tag = 'scoped memory for tpu_custom_call.1']
  #allocation4 [shape = 'u8[512]{0}', space=smem, size = 0x200, scoped, tag = 'prefetched SMEM operand 0']
  %s0 = inlined_call_operand.vmem [shape: s32[2], index: 0, kind: input, shape index: {}]
  %s1 = inlined_call_operand.vmem [shape: s32[1,128], index: 1, kind: input, shape index: {}]
  %s2 = inlined_call_operand.vmem [shape: f32[128,32], index: 2, kind: input, shape index: {}]
  %s3 = inlined_call_operand.vmem [shape: f32[8,1], index: 3, kind: input, shape index: {}]
  %s4 = inlined_call_operand.vmem [shape: f32[2,32], index: 4, kind: input, shape index: {}]
  %s5 = inlined_call_operand.vmem [shape: f32[32,128], index: 5, kind: input, shape index: {}]
  %s6 = inlined_call_operand.vmem [shape: f32[2,128], index: 6, kind: input, shape index: {}]
  %s7 = inlined_call_operand.vmem [shape: f32[128,128], index: 7, kind: input, shape index: {}]
  %s8 = inlined_call_operand.hbm [shape: f32[8,128], index: 8, kind: output, shape index: {}]
  %s9 = sld [smem:[#allocation0]]
  $region46: #{tpu_custom_call.1} parent=0
    _
  %s11 = ssub.s32 1, %s9
  %s12 = scalar_select 0, %s11, %s9
  %s13 = sshll.u32 %s0, 4
  %s14 = int_to_ptr.vmem [resolvable:$true] %s13
  %16 = dma.vmem_to_smem %s14, 16, [#allocation4], [#allocation3]
  %17 = dma.done [#allocation3], 16
  %18 = sfence
  $region1: #{tpu_custom_call.1} parent=0
    #allocation5 [shape = 'u8[4096]{0}', space=vmem, size = 0x1000, scoped, tag = 'output window, operand 0, single buffered']
    #allocation6 [shape = 's32[1]{0}', space=sflag, size = 0x4, scoped, tag = 'scoped memory for tpu_custom_call.1']
    %19 = vsyncpa [#allocation6], 0
    // Predicated region
    $region2: #{tpu_custom_call.1} parent=1 // pred_check
      _
    $region3: #{tpu_custom_call.1} parent=1 // pred_check_branch
      %21 = sbr.rel (0) target = $region5
    $region4: #{tpu_custom_call.1} parent=1 // pred_region
      _
    $region5: #{tpu_custom_call.1} parent=1 // pred_fallthru
      _
    // Predicated region
    $region6: #{tpu_custom_call.1} parent=1 // pred_check
      _
    $region7: #{tpu_custom_call.1} parent=1 // pred_check_branch
      %23 = sbr.rel (0) target = $region9
    $region8: #{tpu_custom_call.1} parent=1 // pred_region
      _
    $region9: #{tpu_custom_call.1} parent=1 // pred_fallthru
      _
    // Predicated region
    $region10: #{tpu_custom_call.1} parent=1 // pred_check
      _
    $region11: #{tpu_custom_call.1} parent=1 // pred_check_branch
      %25 = sbr.rel (0) target = $region13
    $region12: #{tpu_custom_call.1} parent=1 // pred_region
      _
    $region13: #{tpu_custom_call.1} parent=1 // pred_fallthru
      _
    // Predicated region
    $region14: #{tpu_custom_call.1} parent=1 // pred_check
      _
    $region15: #{tpu_custom_call.1} parent=1 // pred_check_branch
      %27 = sbr.rel (0) target = $region17
    $region16: #{tpu_custom_call.1} parent=1 // pred_region
      _
    $region17: #{tpu_custom_call.1} parent=1 // pred_fallthru
      _
    // Predicated region
    $region18: #{tpu_custom_call.1} parent=1 // pred_check
      _
    $region19: #{tpu_custom_call.1} parent=1 // pred_check_branch
      %29 = sbr.rel (0) target = $region21
    $region20: #{tpu_custom_call.1} parent=1 // pred_region
      _
    $region21: #{tpu_custom_call.1} parent=1 // pred_fallthru
      _
    // Predicated region
    $region22: #{tpu_custom_call.1} parent=1 // pred_check
      _
    $region23: #{tpu_custom_call.1} parent=1 // pred_check_branch
      %31 = sbr.rel (0) target = $region25
    $region24: #{tpu_custom_call.1} parent=1 // pred_region
      _
    $region25: #{tpu_custom_call.1} parent=1 // pred_fallthru
      _
    // Predicated region
    $region26: #{tpu_custom_call.1} parent=1 // pred_check
      _
    $region27: #{tpu_custom_call.1} parent=1 // pred_check_branch
      %33 = sbr.rel (0) target = $region29
    $region28: #{tpu_custom_call.1} parent=1 // pred_region
      _
    $region29: #{tpu_custom_call.1} parent=1 // pred_fallthru
      _
    %p34 = scmp.eq.s32.totalorder 0, 0
    // Predicated region
    $region30: #{tpu_custom_call.1} parent=1 // pred_check
      %p35 = pneg %p34
    $region31: #{tpu_custom_call.1} parent=1 // pred_check_branch
      %37 = sbr.rel (%p35) target = $region33
    $region32: #{tpu_custom_call.1} parent=1 // pred_region
      %vm38 = vcmask 261120
      %39 = vst.msk [vmem:[#allocation2] sm:$0xff] %vm38, 0.0
    $region33: #{tpu_custom_call.1} parent=1 // pred_fallthru
      _
    %s40 = sld [smem:[#allocation4 + $0x1]]
    %v41 = vld [vmem:[%s1] sm:$0x1]
    %v42 = vlaneseq
    %v43 = vshrl.u32 %v42, 7
    %v44 = vlaneseq
    %v45 = vshrl.u32 %v44, 7
    %v46 = vsub.s32 0, %v45
    %v47 = vrot.slane %v41, %v46
    %vm48 = vcmp.eq.s32.totalorder %v47, %v43
    %v49 = vsel %vm48, 1, 0
    %v50 = vcvt.s32.f32 %v49
    %v51 = vadd.s32 %v43, 8
    %v52 = vadd.s32 %v43, 16
    %v53 = vadd.s32 %v43, 24
    %v54 = vadd.s32 %v43, 32
    %v55 = vadd.s32 %v43, 40
    %v56 = vadd.s32 %v43, 48
    %v57 = vadd.s32 %v43, 56
    %v58 = vadd.s32 %v43, 64
    %v59 = vadd.s32 %v43, 72
    %v60 = vadd.s32 %v43, 80
    %v61 = vadd.s32 %v43, 88
    %v62 = vadd.s32 %v43, 96
    %v63 = vadd.s32 %v43, 104
    %v64 = vadd.s32 %v43, 112
    %v65 = vadd.s32 %v43, 120
    %s66 = smul.u32 0, 128
    %v67 = vstv %s66
    %v68 = vadd.s32 %v43, %v67
    %v69 = vadd.s32 %v51, %v67
    %v70 = vadd.s32 %v52, %v67
    %v71 = vadd.s32 %v53, %v67
    %v72 = vadd.s32 %v54, %v67
    %v73 = vadd.s32 %v55, %v67
    %v74 = vadd.s32 %v56, %v67
    %v75 = vadd.s32 %v57, %v67
    %v76 = vadd.s32 %v58, %v67
    %v77 = vadd.s32 %v59, %v67
    %v78 = vadd.s32 %v60, %v67
    %v79 = vadd.s32 %v61, %v67
    %v80 = vadd.s32 %v62, %v67
    %v81 = vadd.s32 %v63, %v67
    %v82 = vadd.s32 %v64, %v67
    %v83 = vadd.s32 %v65, %v67
    %v84 = vstv %s40
    %vm85 = vcmp.lt.s32.totalorder %v68, %v84
    %vm86 = vcmp.lt.s32.totalorder %v69, %v84
    %vm87 = vcmp.lt.s32.totalorder %v70, %v84
    %vm88 = vcmp.lt.s32.totalorder %v71, %v84
    %vm89 = vcmp.lt.s32.totalorder %v72, %v84
    %vm90 = vcmp.lt.s32.totalorder %v73, %v84
    %vm91 = vcmp.lt.s32.totalorder %v74, %v84
    %vm92 = vcmp.lt.s32.totalorder %v75, %v84
    %vm93 = vcmp.lt.s32.totalorder %v76, %v84
    %vm94 = vcmp.lt.s32.totalorder %v77, %v84
    %vm95 = vcmp.lt.s32.totalorder %v78, %v84
    %vm96 = vcmp.lt.s32.totalorder %v79, %v84
    %vm97 = vcmp.lt.s32.totalorder %v80, %v84
    %vm98 = vcmp.lt.s32.totalorder %v81, %v84
    %vm99 = vcmp.lt.s32.totalorder %v82, %v84
    %vm100 = vcmp.lt.s32.totalorder %v83, %v84
    %v101 = vld [vmem:[%s2] sm:$0xff]
    %v102 = vld [vmem:[%s2 + $0x8] sm:$0xff]
    %v103 = vld [vmem:[%s2 + $0x10] sm:$0xff]
    %v104 = vld [vmem:[%s2 + $0x18] sm:$0xff]
    %v105 = vld [vmem:[%s2 + $0x20] sm:$0xff]
    %v106 = vld [vmem:[%s2 + $0x28] sm:$0xff]
    %v107 = vld [vmem:[%s2 + $0x30] sm:$0xff]
    %v108 = vld [vmem:[%s2 + $0x38] sm:$0xff]
    %v109 = vld [vmem:[%s2 + $0x40] sm:$0xff]
    %v110 = vld [vmem:[%s2 + $0x48] sm:$0xff]
    %v111 = vld [vmem:[%s2 + $0x50] sm:$0xff]
    %v112 = vld [vmem:[%s2 + $0x58] sm:$0xff]
    %v113 = vld [vmem:[%s2 + $0x60] sm:$0xff]
    %v114 = vld [vmem:[%s2 + $0x68] sm:$0xff]
    %v115 = vld [vmem:[%s2 + $0x70] sm:$0xff]
    %v116 = vld [vmem:[%s2 + $0x78] sm:$0xff]
    %v117 = vsel %vm85, 1, 0
    %v118 = vsel %vm86, 1, 0
    %v119 = vsel %vm87, 1, 0
    %v120 = vsel %vm88, 1, 0
    %v121 = vsel %vm89, 1, 0
    %v122 = vsel %vm90, 1, 0
    %v123 = vsel %vm91, 1, 0
    %v124 = vsel %vm92, 1, 0
    %v125 = vsel %vm93, 1, 0
    %v126 = vsel %vm94, 1, 0
    %v127 = vsel %vm95, 1, 0
    %v128 = vsel %vm96, 1, 0
    %v129 = vsel %vm97, 1, 0
    %v130 = vsel %vm98, 1, 0
    %v131 = vsel %vm99, 1, 0
    %v132 = vsel %vm100, 1, 0
    %vm133 = vcmp.eq.s32.totalorder %v117, 1
    %vm134 = vcmp.eq.s32.totalorder %v118, 1
    %vm135 = vcmp.eq.s32.totalorder %v119, 1
    %vm136 = vcmp.eq.s32.totalorder %v120, 1
    %vm137 = vcmp.eq.s32.totalorder %v121, 1
    %vm138 = vcmp.eq.s32.totalorder %v122, 1
    %vm139 = vcmp.eq.s32.totalorder %v123, 1
    %vm140 = vcmp.eq.s32.totalorder %v124, 1
    %vm141 = vcmp.eq.s32.totalorder %v125, 1
    %vm142 = vcmp.eq.s32.totalorder %v126, 1
    %vm143 = vcmp.eq.s32.totalorder %v127, 1
    %vm144 = vcmp.eq.s32.totalorder %v128, 1
    %vm145 = vcmp.eq.s32.totalorder %v129, 1
    %vm146 = vcmp.eq.s32.totalorder %v130, 1
    %vm147 = vcmp.eq.s32.totalorder %v131, 1
    %vm148 = vcmp.eq.s32.totalorder %v132, 1
    %v149 = vsel %vm133, %v101, 0.0
    %v150 = vsel %vm134, %v102, 0.0
    %v151 = vsel %vm135, %v103, 0.0
    %v152 = vsel %vm136, %v104, 0.0
    %v153 = vsel %vm137, %v105, 0.0
    %v154 = vsel %vm138, %v106, 0.0
    %v155 = vsel %vm139, %v107, 0.0
    %v156 = vsel %vm140, %v108, 0.0
    %v157 = vsel %vm141, %v109, 0.0
    %v158 = vsel %vm142, %v110, 0.0
    %v159 = vsel %vm143, %v111, 0.0
    %v160 = vsel %vm144, %v112, 0.0
    %v161 = vsel %vm145, %v113, 0.0
    %v162 = vsel %vm146, %v114, 0.0
    %v163 = vsel %vm147, %v115, 0.0
    %v164 = vsel %vm148, %v116, 0.0
    %v165 = vld [vmem:[#allocation2] sm:$0xff]
    %166 = vmatprep.subr.mxu0 0.0
    %167 = vmatpush1.msra.mxu0 %v149
    %168 = vmatprep.subr.mxu0 0.0
    %169 = vmatpush1.msra.mxu0 %v150
    %170 = vmatprep.subr.mxu0 0.0
    %171 = vmatpush1.msra.mxu0 %v151
    %172 = vmatprep.subr.mxu0 0.0
    %173 = vmatpush1.msra.mxu0 %v152
    %174 = vmatprep.subr.mxu0 0.0
    %175 = vmatpush1.msra.mxu0 %v153
    %176 = vmatprep.subr.mxu0 0.0
    %177 = vmatpush1.msra.mxu0 %v154
    %178 = vmatprep.subr.mxu0 0.0
    %179 = vmatpush1.msra.mxu0 %v155
    %180 = vmatprep.subr.mxu0 0.0
    %181 = vmatpush1.msra.mxu0 %v156
    %182 = vmatprep.subr.mxu0 0.0
    %183 = vmatpush1.msra.mxu0 %v157
    %184 = vmatprep.subr.mxu0 0.0
    %185 = vmatpush1.msra.mxu0 %v158
    %186 = vmatprep.subr.mxu0 0.0
    %187 = vmatpush1.msra.mxu0 %v159
    %188 = vmatprep.subr.mxu0 0.0
    %189 = vmatpush1.msra.mxu0 %v160
    %190 = vmatprep.subr.mxu0 0.0
    %191 = vmatpush1.msra.mxu0 %v161
    %192 = vmatprep.subr.mxu0 0.0
    %193 = vmatpush1.msra.mxu0 %v162
    %194 = vmatprep.subr.mxu0 0.0
    %195 = vmatpush1.msra.mxu0 %v163
    %196 = vmatprep.subr.mxu0 0.0
    %197 = vmatpush1.msra.mxu0 %v164
    %198 = vmatprep.subr.mxu0 0.0
    %199 = vmatpush1.msra.mxu0 0.0
    %200 = vmatprep.subr.mxu0 0.0
    %201 = vmatpush1.msra.mxu0 0.0
    %202 = vmatprep.subr.mxu0 0.0
    %203 = vmatpush1.msra.mxu0 0.0
    %204 = vmatprep.subr.mxu0 0.0
    %205 = vmatpush1.msra.mxu0 0.0
    %206 = vmatprep.subr.mxu0 0.0
    %207 = vmatpush1.msra.mxu0 0.0
    %208 = vmatprep.subr.mxu0 0.0
    %209 = vmatpush1.msra.mxu0 0.0
    %210 = vmatprep.subr.mxu0 0.0
    %211 = vmatpush1.msra.mxu0 0.0
    %212 = vmatprep.subr.mxu0 0.0
    %213 = vmatpush1.msra.mxu0 0.0
    %214 = vmatprep.subr.mxu0 0.0
    %215 = vmatpush1.msra.mxu0 0.0
    %216 = vmatprep.subr.mxu0 0.0
    %217 = vmatpush1.msra.mxu0 0.0
    %218 = vmatprep.subr.mxu0 0.0
    %219 = vmatpush1.msra.mxu0 0.0
    %220 = vmatprep.subr.mxu0 0.0
    %221 = vmatpush1.msra.mxu0 0.0
    %222 = vmatprep.subr.mxu0 0.0
    %223 = vmatpush1.msra.mxu0 0.0
    %224 = vmatprep.subr.mxu0 0.0
    %225 = vmatpush1.msra.mxu0 0.0
    %226 = vmatprep.subr.mxu0 0.0
    %227 = vmatpush1.msra.mxu0 0.0
    %228 = vmatprep.subr.mxu0 0.0
    %229 = vmatpush1.msra.mxu0 0.0
    %230 = vmatprep.mubr.f32.mxu0 0.0
    %231 = vmatmul.mubr.f32.gmra.mrb[0].mxu0 %v50
    %v232 = vpop.f32.mrb[0].mxu0
    %v233 = vadd.f32 0.0, %v232
    %v234 = vpop.f32.mrb[0].mxu0
    %235 = vdwg.mxu0
    %v236 = vadd.f32 %v165, %v233
    %vm237 = vcmask 261120
    %238 = vst.msk [vmem:[#allocation2] sm:$0xff] %vm237, %v236
    // Predicated region
    $region34: #{tpu_custom_call.1} parent=1 // pred_check
      %p239 = pneg %p34
    $region35: #{tpu_custom_call.1} parent=1 // pred_check_branch
      %241 = sbr.rel (%p239) target = $region37
    $region36: #{tpu_custom_call.1} parent=1 // pred_region
      %s242 = sld [smem:[#allocation4]]
      %v243 = vld [vmem:[#allocation2] sm:$0xff]
      %v244 = vld [vmem:[%s3] sm:$0xff]
      %246 = vset.pattern.permute.xlu0 0
      %247 = vperm.xlu0 %246, %v244
      %v248 = vpop.permute.xlu0 %247
      %v250 = vmul.f32 %v243, %v248
      %v251 = vstv %s242
      %vm252 = vcmp.lt.s32.totalorder %v43, %v251
      %v253 = vsel %vm252, 1, 0
      %v254 = vcvt.s32.f32 %v253
      %s255 = scvt.s32.f32 %s242
      %v256 = vstv %s255
      %v257 = vrcp.pop %v256
      %s258 = vtos %v257
      %v259 = vmul.f32 %v250, %v254
      %v260 = vsel %vm237, %v259, 0.0
      %v261 = vrot.slane %v260, 4
      %v262 = vadd.f32 %v260, %v261
      %v263 = vrot.slane %v262, 2
      %v264 = vadd.f32 %v262, %v263
      %v265 = vrot.slane %v264, 1
      %v266 = vadd.f32 %v264, %v265
      %v267 = vstv %s258
      %v268 = vmul.f32 %v266, %v267
      %v269 = vsub.f32 %v250, %v268
      %v270 = vmul.f32 %v269, %v269
      %v271 = vmul.f32 %v270, %v254
      %v272 = vsel %vm237, %v271, 0.0
      %v273 = vrot.slane %v272, 4
      %v274 = vadd.f32 %v272, %v273
      %v275 = vrot.slane %v274, 2
      %v276 = vadd.f32 %v274, %v275
      %v277 = vrot.slane %v276, 1
      %v278 = vadd.f32 %v276, %v277
      %v279 = vmul.f32 %v278, %v267
      %v280 = vadd.f32 %v279, 1e-05
      %v281 = vrsqrt.pop %v280
      %v282 = vmul.f32 %v269, %v281
      %v283 = vld [vmem:[%s4] sm:$0x1]
      %v284 = vlaneseq
      %v285 = vshrl.u32 %v284, 7
      %v286 = vsub.s32 0, %v285
      %v287 = vrot.slane %v283, %v286
      %v288 = vmul.f32 %v282, %v287
      %v289 = vld [vmem:[%s4 + $0x1] sm:$0x1]
      %v290 = vlaneseq
      %v291 = vshrl.u32 %v290, 7
      %v292 = vsub.s32 0, %v291
      %v293 = vrot.slane %v289, %v292
      %v294 = vadd.f32 %v288, %v293
      %v295 = vld [vmem:[%s5] sm:$0xff]
      %v296 = vld [vmem:[%s5 + $0x8] sm:$0xff]
      %v297 = vld [vmem:[%s5 + $0x10] sm:$0xff]
      %v298 = vld [vmem:[%s5 + $0x18] sm:$0xff]
      %v299 = vld [vmem:[%s6] sm:$0x1]
      %v300 = vlaneseq
      %v301 = vshrl.u32 %v300, 7
      %v302 = vsub.s32 0, %v301
      %v303 = vrot.slane %v299, %v302
      %v305 = vsel %vm237, %v294, 0
      %307 = vmatprep.subr.mxu0 0.0
      %308 = vmatpush1.msra.mxu0 %v295
      %309 = vmatprep.subr.mxu0 0.0
      %310 = vmatpush1.msra.mxu0 %v296
      %311 = vmatprep.subr.mxu0 0.0
      %312 = vmatpush1.msra.mxu0 %v297
      %313 = vmatprep.subr.mxu0 0.0
      %314 = vmatpush1.msra.mxu0 %v298
      %315 = vmatprep.subr.mxu0 0.0
      %316 = vmatpush1.msra.mxu0 0.0
      %317 = vmatprep.subr.mxu0 0.0
      %318 = vmatpush1.msra.mxu0 0.0
      %319 = vmatprep.subr.mxu0 0.0
      %320 = vmatpush1.msra.mxu0 0.0
      %321 = vmatprep.subr.mxu0 0.0
      %322 = vmatpush1.msra.mxu0 0.0
      %323 = vmatprep.subr.mxu0 0.0
      %324 = vmatpush1.msra.mxu0 0.0
      %325 = vmatprep.subr.mxu0 0.0
      %326 = vmatpush1.msra.mxu0 0.0
      %327 = vmatprep.subr.mxu0 0.0
      %328 = vmatpush1.msra.mxu0 0.0
      %329 = vmatprep.subr.mxu0 0.0
      %330 = vmatpush1.msra.mxu0 0.0
      %331 = vmatprep.subr.mxu0 0.0
      %332 = vmatpush1.msra.mxu0 0.0
      %333 = vmatprep.subr.mxu0 0.0
      %334 = vmatpush1.msra.mxu0 0.0
      %335 = vmatprep.subr.mxu0 0.0
      %336 = vmatpush1.msra.mxu0 0.0
      %337 = vmatprep.subr.mxu0 0.0
      %338 = vmatpush1.msra.mxu0 0.0
      %339 = vmatprep.subr.mxu0 0.0
      %340 = vmatpush1.msra.mxu0 0.0
      %341 = vmatprep.subr.mxu0 0.0
      %342 = vmatpush1.msra.mxu0 0.0
      %343 = vmatprep.subr.mxu0 0.0
      %344 = vmatpush1.msra.mxu0 0.0
      %345 = vmatprep.subr.mxu0 0.0
      %346 = vmatpush1.msra.mxu0 0.0
      %347 = vmatprep.subr.mxu0 0.0
      %348 = vmatpush1.msra.mxu0 0.0
      %349 = vmatprep.subr.mxu0 0.0
      %350 = vmatpush1.msra.mxu0 0.0
      %351 = vmatprep.subr.mxu0 0.0
      %352 = vmatpush1.msra.mxu0 0.0
      %353 = vmatprep.subr.mxu0 0.0
      %354 = vmatpush1.msra.mxu0 0.0
      %355 = vmatprep.subr.mxu0 0.0
      %356 = vmatpush1.msra.mxu0 0.0
      %357 = vmatprep.subr.mxu0 0.0
      %358 = vmatpush1.msra.mxu0 0.0
      %359 = vmatprep.subr.mxu0 0.0
      %360 = vmatpush1.msra.mxu0 0.0
      %361 = vmatprep.subr.mxu0 0.0
      %362 = vmatpush1.msra.mxu0 0.0
      %363 = vmatprep.subr.mxu0 0.0
      %364 = vmatpush1.msra.mxu0 0.0
      %365 = vmatprep.subr.mxu0 0.0
      %366 = vmatpush1.msra.mxu0 0.0
      %367 = vmatprep.subr.mxu0 0.0
      %368 = vmatpush1.msra.mxu0 0.0
      %369 = vmatprep.subr.mxu0 0.0
      %370 = vmatpush1.msra.mxu0 0.0
      %371 = vmatprep.mubr.f32.mxu0 0.0
      %372 = vmatmul.mubr.f32.gmra.mrb[0].mxu0 %v305
      %v373 = vpop.f32.mrb[0].mxu0
      %v374 = vadd.f32 %v303, %v373
      %v375 = vpop.f32.mrb[0].mxu0
      %376 = vdwg.mxu0
      %vm377 = vcmp.ge.f32.partialorder %v374, 0.0
      %v378 = vmul.f32 %v374, 0.01
      %v379 = vsel %vm377, %v374, %v378
      %v380 = vld [vmem:[%s7] sm:$0xff]
      %v381 = vld [vmem:[%s7 + $0x8] sm:$0xff]
      %v382 = vld [vmem:[%s7 + $0x10] sm:$0xff]
      %v383 = vld [vmem:[%s7 + $0x18] sm:$0xff]
      %v384 = vld [vmem:[%s7 + $0x20] sm:$0xff]
      %v385 = vld [vmem:[%s7 + $0x28] sm:$0xff]
      %v386 = vld [vmem:[%s7 + $0x30] sm:$0xff]
      %v387 = vld [vmem:[%s7 + $0x38] sm:$0xff]
      %v388 = vld [vmem:[%s7 + $0x40] sm:$0xff]
      %v389 = vld [vmem:[%s7 + $0x48] sm:$0xff]
      %v390 = vld [vmem:[%s7 + $0x50] sm:$0xff]
      %v391 = vld [vmem:[%s7 + $0x58] sm:$0xff]
      %v392 = vld [vmem:[%s7 + $0x60] sm:$0xff]
      %v393 = vld [vmem:[%s7 + $0x68] sm:$0xff]
      %v394 = vld [vmem:[%s7 + $0x70] sm:$0xff]
      %v395 = vld [vmem:[%s7 + $0x78] sm:$0xff]
      %v396 = vld [vmem:[%s6 + $0x1] sm:$0x1]
      %v397 = vlaneseq
      %v398 = vshrl.u32 %v397, 7
      %v399 = vsub.s32 0, %v398
      %v400 = vrot.slane %v396, %v399
      %401 = vmatprep.subr.mxu0 0.0
      %402 = vmatpush1.msra.mxu0 %v380
      %403 = vmatprep.subr.mxu0 0.0
      %404 = vmatpush1.msra.mxu0 %v381
      %405 = vmatprep.subr.mxu0 0.0
      %406 = vmatpush1.msra.mxu0 %v382
      %407 = vmatprep.subr.mxu0 0.0
      %408 = vmatpush1.msra.mxu0 %v383
      %409 = vmatprep.subr.mxu0 0.0
      %410 = vmatpush1.msra.mxu0 %v384
      %411 = vmatprep.subr.mxu0 0.0
      %412 = vmatpush1.msra.mxu0 %v385
      %413 = vmatprep.subr.mxu0 0.0
      %414 = vmatpush1.msra.mxu0 %v386
      %415 = vmatprep.subr.mxu0 0.0
      %416 = vmatpush1.msra.mxu0 %v387
      %417 = vmatprep.subr.mxu0 0.0
      %418 = vmatpush1.msra.mxu0 %v388
      %419 = vmatprep.subr.mxu0 0.0
      %420 = vmatpush1.msra.mxu0 %v389
      %421 = vmatprep.subr.mxu0 0.0
      %422 = vmatpush1.msra.mxu0 %v390
      %423 = vmatprep.subr.mxu0 0.0
      %424 = vmatpush1.msra.mxu0 %v391
      %425 = vmatprep.subr.mxu0 0.0
      %426 = vmatpush1.msra.mxu0 %v392
      %427 = vmatprep.subr.mxu0 0.0
      %428 = vmatpush1.msra.mxu0 %v393
      %429 = vmatprep.subr.mxu0 0.0
      %430 = vmatpush1.msra.mxu0 %v394
      %431 = vmatprep.subr.mxu0 0.0
      %432 = vmatpush1.msra.mxu0 %v395
      %433 = vmatprep.subr.mxu0 0.0
      %434 = vmatpush1.msra.mxu0 0.0
      %435 = vmatprep.subr.mxu0 0.0
      %436 = vmatpush1.msra.mxu0 0.0
      %437 = vmatprep.subr.mxu0 0.0
      %438 = vmatpush1.msra.mxu0 0.0
      %439 = vmatprep.subr.mxu0 0.0
      %440 = vmatpush1.msra.mxu0 0.0
      %441 = vmatprep.subr.mxu0 0.0
      %442 = vmatpush1.msra.mxu0 0.0
      %443 = vmatprep.subr.mxu0 0.0
      %444 = vmatpush1.msra.mxu0 0.0
      %445 = vmatprep.subr.mxu0 0.0
      %446 = vmatpush1.msra.mxu0 0.0
      %447 = vmatprep.subr.mxu0 0.0
      %448 = vmatpush1.msra.mxu0 0.0
      %449 = vmatprep.subr.mxu0 0.0
      %450 = vmatpush1.msra.mxu0 0.0
      %451 = vmatprep.subr.mxu0 0.0
      %452 = vmatpush1.msra.mxu0 0.0
      %453 = vmatprep.subr.mxu0 0.0
      %454 = vmatpush1.msra.mxu0 0.0
      %455 = vmatprep.subr.mxu0 0.0
      %456 = vmatpush1.msra.mxu0 0.0
      %457 = vmatprep.subr.mxu0 0.0
      %458 = vmatpush1.msra.mxu0 0.0
      %459 = vmatprep.subr.mxu0 0.0
      %460 = vmatpush1.msra.mxu0 0.0
      %461 = vmatprep.subr.mxu0 0.0
      %462 = vmatpush1.msra.mxu0 0.0
      %463 = vmatprep.subr.mxu0 0.0
      %464 = vmatpush1.msra.mxu0 0.0
      %465 = vmatprep.mubr.f32.mxu0 0.0
      %466 = vmatmul.mubr.f32.gmra.mrb[0].mxu0 %v379
      %v467 = vpop.f32.mrb[0].mxu0
      %v468 = vadd.f32 %v400, %v467
      %v469 = vpop.f32.mrb[0].mxu0
      %470 = vdwg.mxu0
      %471 = vst [vmem:[#allocation5] sm:$0xff] %v468
    $region37: #{tpu_custom_call.1} parent=1 // pred_fallthru
      _
    // Predicated region
    $region38: #{tpu_custom_call.1} parent=1 // pred_check
      _
    $region39: #{tpu_custom_call.1} parent=1 // pred_check_branch
      %473 = sbr.rel (0) target = $region41
    $region40: #{tpu_custom_call.1} parent=1 // pred_region
      %s475 = ssub.s32 128, 128
      %476 = vsyncadd [#allocation6], %s475
      %s478 = sshll.u32 [#allocation5], 4
      %s479 = int_to_ptr.vmem [resolvable:$true] %s478
      %481 = dma.vmem_to_hbm [thread:$0]  %s479, 128, %s8, [#allocation6]
    $region41: #{tpu_custom_call.1} parent=1 // pred_fallthru
      _
    // Predicated region
    $region42: #{tpu_custom_call.1} parent=1 // pred_check
      _
    $region43: #{tpu_custom_call.1} parent=1 // pred_check_branch
      %483 = sbr.rel (0) target = $region45
    $region44: #{tpu_custom_call.1} parent=1 // pred_region
      %484 = dma.done [#allocation6], 128
    $region45: #{tpu_custom_call.1} parent=1 // pred_fallthru
      _
    %485 = vsyncpa [#allocation6], 1

</llo_original>
